<compile_context>
chip_gen: v5e
topology: v5e:2x2
jax: 0.10.0
libtpu: 0.0.40
codegen_flags: <defaults>
</compile_context>

<pallas_src>
import functools

import jax
import jax.numpy as jnp
from jax import lax
from jax.experimental import pallas as pl
from jax.experimental.pallas import tpu as pltpu


def _round_up(x, m):
    return ((x + m - 1) // m) * m


def _cdiv(a, b):
    return (a + b - 1) // b


_SELU_ALPHA = 1.6732632423543772848170429916717
_SELU_SCALE = 1.0507009873554804934193349852946


def _linear_act_kernel(x_ref, w_ref, b_ref, o_ref, acc_ref, *, activation, precision):
    # x_ref:  (tm, tk)  activations tile (compute dtype, e.g. bf16)
    # w_ref:  (tk, tn)  pre-transposed weight tile (compute dtype)
    # b_ref:  (1,  tn)  bias tile (f32)
    # o_ref:  (tm, tn)  output tile
    # acc_ref:(tm, tn)  fp32 accumulator, resident across the K grid axis
    k = pl.program_id(2)

    @pl.when(k == 0)
    def _():
        # Seed the accumulator with the broadcast bias -> no epilogue add.
        acc_ref[...] = jnp.broadcast_to(
            b_ref[...].astype(jnp.float32), acc_ref.shape)

    # Pure MXU accumulate on the inner (K) axis: NN layout, fp32 accumulation.
    acc_ref[...] += jnp.dot(
        x_ref[...], w_ref[...],
        preferred_element_type=jnp.float32,
        precision=precision)

    # Finalize once per output tile: activation + cast + store.
    @pl.when(k == pl.num_programs(2) - 1)
    def _():
        acc = acc_ref[...]
        if activation == "relu":
            acc = jnp.maximum(acc, 0.0)
        elif activation == "selu":
            acc = _SELU_SCALE * jnp.where(
                acc > 0.0, acc, _SELU_ALPHA * (jnp.exp(acc) - 1.0))
        # else: identity
        o_ref[...] = acc.astype(o_ref.dtype)


def linear_forward(x, weight, bias, activation="relu", *,
                   tm=None, tn=512, tk=512, compute_dtype=jnp.bfloat16):
    """Pallas equivalent of Linear.forward (y = act(x @ W^T + b)).

    x:      (batch, in_features)        float32
    weight: (out_features, in_features) float32  (PyTorch convention)
    bias:   (out_features,)             float32
    """
    M, K = x.shape
    N, K_w = weight.shape
    assert K == K_w, "in_features mismatch between x and weight"
    assert bias.shape == (N,)

    compute_dtype = jnp.dtype(compute_dtype)
    # bf16 packs 16 rows per vreg sublane-group; f32 packs 8.
    m_align = 16 if compute_dtype.itemsize == 2 else 8

    # ---- Tile selection ----------------------------------------------------
    m_full = _round_up(M, m_align)
    n_full = _round_up(N, 128)
    k_full = _round_up(K, 128)

    if tm is None:
        # Prefer the full (padded) batch so W streams from HBM exactly once.
        tm = min(m_full, 1024)
    else:
        tm = min(_round_up(tm, m_align), m_full)
    tn = _round_up(max(128, min(tn, n_full)), 128)
    tk = _round_up(max(128, min(tk, k_full)), 128)

    # v7x has 2 TensorCores and shards the "parallel" (i, j) axes across them.
    # If the parallel grid collapsed to a single tile, try a clean 2-way split
    # (N first so W is still read once; otherwise M).
    if _cdiv(m_full, tm) * _cdiv(n_full, tn) == 1:
        if tn >= 256 and (tn // 2) % 128 == 0:
            tn //= 2
        elif tm >= 2 * m_align and (tm // 2) % m_align == 0:
            tm //= 2

    M_pad = _round_up(M, tm)
    N_pad = _round_up(N, tn)
    K_pad = _round_up(K, tk)

    # ---- Operand prep: cast to MXU dtype, transpose W once, zero-pad -------
    x_p = x.astype(compute_dtype)
    w_p = weight.T.astype(compute_dtype)          # (K, N): NN layout for the MXU
    b_p = bias.astype(jnp.float32).reshape(1, N)
    if (M_pad, K_pad) != (M, K):
        x_p = jnp.pad(x_p, ((0, M_pad - M), (0, K_pad - K)))
    if (K_pad, N_pad) != (K, N):
        w_p = jnp.pad(w_p, ((0, K_pad - K), (0, N_pad - N)))
    if N_pad != N:
        b_p = jnp.pad(b_p, ((0, 0), (0, N_pad - N)))

    grid = (M_pad // tm, N_pad // tn, K_pad // tk)

    # Strict-f32 path keeps HIGHEST precision; bf16 path is the deliberate
    # fast path (fp32 accumulation on the MXU).
    precision = lax.Precision.HIGHEST if compute_dtype == jnp.dtype(jnp.float32) else None
    kernel = functools.partial(
        _linear_act_kernel, activation=activation, precision=precision)

    # Generation-aware VMEM budget: ~3/4 of per-core VMEM
    # (≈96 MiB on v5e/v6e's 128 MiB, ≈48 MiB on v7x's 64 MiB).
    try:
        vmem_cap = int(pltpu.get_tpu_info().vmem_capacity_bytes)
    except Exception:
        vmem_cap = 64 * 1024 * 1024
    vmem_limit = int(min(vmem_cap * 3 // 4, 112 * 1024 * 1024))

    itemsize = compute_dtype.itemsize
    cost = pl.CostEstimate(
        flops=2 * M_pad * N_pad * K_pad,
        transcendentals=(M_pad * N_pad) if activation == "selu" else 0,
        bytes_accessed=(M_pad * K_pad * itemsize          # x
                        + K_pad * N_pad * itemsize        # w
                        + M_pad * N_pad * x.dtype.itemsize  # y
                        + N_pad * 4),                     # bias
    )

    out = pl.pallas_call(
        kernel,
        out_shape=jax.ShapeDtypeStruct((M_pad, N_pad), x.dtype),
        grid_spec=pltpu.PrefetchScalarGridSpec(
            num_scalar_prefetch=0,
            grid=grid,
            in_specs=[
                pl.BlockSpec((tm, tk), lambda i, j, k: (i, k)),   # x
                pl.BlockSpec((tk, tn), lambda i, j, k: (k, j)),   # W^T (K, N)
                pl.BlockSpec((1, tn), lambda i, j, k: (0, j)),    # bias
            ],
            out_specs=pl.BlockSpec((tm, tn), lambda i, j, k: (i, j)),
            scratch_shapes=[pltpu.VMEM((tm, tn), jnp.float32)],
        ),
        compiler_params=pltpu.CompilerParams(
            dimension_semantics=("parallel", "parallel", "arbitrary"),
            vmem_limit_bytes=vmem_limit,
        ),
        cost_estimate=cost,
    )(x_p, w_p, b_p)

    if (M_pad, N_pad) != (M, N):
        out = out[:M, :N]
    return out


def _init_linear_params(key, in_features, out_features):
    # Mimic nn.Linear's default uniform(-k, k), k = 1/sqrt(in_features).
    k = 1.0 / jnp.sqrt(jnp.float32(in_features))
    wkey, bkey = jax.random.split(key)
    weight = jax.random.uniform(
        wkey, (out_features, in_features), jnp.float32, minval=-k, maxval=k)
    bias = jax.random.uniform(
        bkey, (out_features,), jnp.float32, minval=-k, maxval=k)
    return weight, bias


def _ref_forward(x, weight, bias, activation):
    y = x @ weight.T + bias
    if activation == "relu":
        return jnp.maximum(y, 0.0)
    if activation == "selu":
        return _SELU_SCALE * jnp.where(
            y > 0.0, y, _SELU_ALPHA * (jnp.exp(y) - 1.0))
    return y


if __name__ == "__main__":
    key = jax.random.PRNGKey(0)

    # --- Case 1: module-sized demo (small, unaligned shapes; relu) ---------
    # Strict f32 path (precision=HIGHEST) -> tight tolerance.
    k1, k2, key = jax.random.split(key, 3)
    batch, in_features, out_features = 8, 32, 16
    x = jax.random.normal(k1, (batch, in_features), jnp.float32)
    weight, bias = _init_linear_params(k2, in_features, out_features)

    out = linear_forward(x, weight, bias, activation="relu",
                         compute_dtype=jnp.float32)
    out = jax.block_until_ready(out)
    ref = _ref_forward(x, weight, bias, "relu")
    assert out.shape == (batch, out_features)
    assert jnp.allclose(out, ref, atol=1e-5, rtol=1e-5)

    # --- Case 2: multi-tile grid (K accumulation + finalize; selu; bf16) ---
    k3, k4, key = jax.random.split(key, 3)
    batch2, in2, out2 = 128, 512, 384
    x2 = jax.random.normal(k3, (batch2, in2), jnp.float32)
    w2, b2 = _init_linear_params(k4, in2, out2)

    out_2 = linear_forward(x2, w2, b2, activation="selu", tk=256)  # bf16 default
    out_2 = jax.block_until_ready(out_2)
    ref_2 = _ref_forward(x2, w2, b2, "selu")
    assert out_2.shape == (batch2, out2)
    assert jnp.allclose(out_2, ref_2, atol=5e-2, rtol=5e-2)

    print("KERNEL_OK")
</pallas_src>

<mosaic_0001>
module attributes {stable_mosaic.version = 11 : i64} {
  func.func @_linear_act_kernel(%arg0: i32, %arg1: i32, %arg2: i32, %arg3: memref<8x128xf32, #tpu.memory_space<vmem>>, %arg4: memref<128x128xf32, #tpu.memory_space<vmem>>, %arg5: memref<1x128xf32, #tpu.memory_space<vmem>>, %arg6: memref<8x128xf32, #tpu.memory_space<vmem>>, %arg7: memref<8x128xf32, #tpu.memory_space<vmem>>) attributes {dimension_semantics = [#tpu.dimension_semantics<parallel>, #tpu.dimension_semantics<parallel>, #tpu.dimension_semantics<arbitrary>], iteration_bounds = array<i64: 1, 1, 1>, scalar_prefetch = 0 : i64, scratch_operands = 1 : i64, tpu.core_type = #tpu.core_type<tc>, window_params = [{transform_indices = @transform_0, window_bounds = array<i64: 8, 128>}, {transform_indices = @transform_1, window_bounds = array<i64: 128, 128>}, {transform_indices = @transform_2, window_bounds = array<i64: 1, 128>}, {transform_indices = @transform_3, window_bounds = array<i64: 8, 128>}]} {
    %c0_i32 = arith.constant 0 : i32
    %0 = arith.cmpi eq, %arg2, %c0_i32 : i32
    %1 = arith.extui %0 : i1 to i32
    %c0_i32_0 = arith.constant 0 : i32
    %2 = arith.cmpi ne, %1, %c0_i32_0 : i32
    scf.if %2 {
      %c0_10 = arith.constant 0 : index
      %c0_11 = arith.constant 0 : index
      %12 = vector.load %arg5[%c0_10, %c0_11] : memref<1x128xf32, #tpu.memory_space<vmem>>, vector<1x128xf32>
      %13 = vector.shape_cast %12 : vector<1x128xf32> to vector<1x128xf32>
      %14 = vector.broadcast %13 : vector<1x128xf32> to vector<8x128xf32>
      %c0_12 = arith.constant 0 : index
      %c0_13 = arith.constant 0 : index
      %15 = vector.load %arg7[%c0_12, %c0_13] : memref<8x128xf32, #tpu.memory_space<vmem>>, vector<8x128xf32>
      tpu.vector_store %arg7[%c0_12, %c0_13], %14 {strides = array<i32>} : memref<8x128xf32, #tpu.memory_space<vmem>>, vector<8x128xf32>,
    } else {
    }
    %c0 = arith.constant 0 : index
    %c0_1 = arith.constant 0 : index
    %3 = vector.load %arg7[%c0, %c0_1] : memref<8x128xf32, #tpu.memory_space<vmem>>, vector<8x128xf32>
    %c0_2 = arith.constant 0 : index
    %c0_3 = arith.constant 0 : index
    %4 = vector.load %arg3[%c0_2, %c0_3] : memref<8x128xf32, #tpu.memory_space<vmem>>, vector<8x128xf32>
    %c0_4 = arith.constant 0 : index
    %c0_5 = arith.constant 0 : index
    %5 = vector.load %arg4[%c0_4, %c0_5] : memref<128x128xf32, #tpu.memory_space<vmem>>, vector<128x128xf32>
    %cst = arith.constant dense<0.000000e+00> : vector<8x128xf32>
    %6 = tpu.matmul %4, %5, %cst {dimension_numbers = #tpu.dot_dimension_numbers<[1], [0], [0], [1], [0, 0, 1, 1], [], []>, precision = #tpu.contract_precision<fp32>} : vector<8x128xf32>, vector<128x128xf32>, vector<8x128xf32> -> vector<8x128xf32>
    %7 = arith.addf %3, %6 : vector<8x128xf32>
    %c0_6 = arith.constant 0 : index
    %c0_7 = arith.constant 0 : index
    %8 = vector.load %arg7[%c0_6, %c0_7] : memref<8x128xf32, #tpu.memory_space<vmem>>, vector<8x128xf32>
    tpu.vector_store %arg7[%c0_6, %c0_7], %7 {strides = array<i32>} : memref<8x128xf32, #tpu.memory_space<vmem>>, vector<8x128xf32>,
    %c0_i32_8 = arith.constant 0 : i32
    %9 = arith.cmpi eq, %arg2, %c0_i32_8 : i32
    %10 = arith.extui %9 : i1 to i32
    %c0_i32_9 = arith.constant 0 : i32
    %11 = arith.cmpi ne, %10, %c0_i32_9 : i32
    scf.if %11 {
      %c0_10 = arith.constant 0 : index
      %c0_11 = arith.constant 0 : index
      %12 = vector.load %arg7[%c0_10, %c0_11] : memref<8x128xf32, #tpu.memory_space<vmem>>, vector<8x128xf32>
      %cst_12 = arith.constant 0.000000e+00 : f32
      %13 = vector.broadcast %cst_12 : f32 to vector<8x128xf32>
      %14 = arith.maximumf %12, %13 : vector<8x128xf32>
      %c0_13 = arith.constant 0 : index
      %c0_14 = arith.constant 0 : index
      %15 = vector.load %arg6[%c0_13, %c0_14] : memref<8x128xf32, #tpu.memory_space<vmem>>, vector<8x128xf32>
      tpu.vector_store %arg6[%c0_13, %c0_14], %14 {strides = array<i32>} : memref<8x128xf32, #tpu.memory_space<vmem>>, vector<8x128xf32>,
    } else {
    }
    return
  }
  func.func @transform_0(%arg0: i32, %arg1: i32, %arg2: i32) -> (i32, i32) {
    %c0_i32 = arith.constant 0 : i32
    return %arg0, %arg2 : i32, i32
  }
  func.func @transform_1(%arg0: i32, %arg1: i32, %arg2: i32) -> (i32, i32) {
    %c0_i32 = arith.constant 0 : i32
    return %arg2, %arg1 : i32, i32
  }
  func.func @transform_2(%arg0: i32, %arg1: i32, %arg2: i32) -> (i32, i32) {
    %c0_i32 = arith.constant 0 : i32
    %c0_i32_0 = arith.constant 0 : i32
    return %c0_i32, %arg1 : i32, i32
  }
  func.func @transform_3(%arg0: i32, %arg1: i32, %arg2: i32) -> (i32, i32) {
    %c0_i32 = arith.constant 0 : i32
    return %arg0, %arg1 : i32, i32
  }
}

</mosaic_0001>

<llo_original>
// kernel: tpu_custom_call.1
$region0: #{tpu_custom_call.1}
  #allocation0 [shape = 'u32[]', space=smem, size = 0x4, offset = 0x4, fixed_abs, tag = 'smem constant byte address 0x4 - core index']
  #allocation1 [shape = 'u32[72,128]{1,0:T(1,128)}', space=vmem, size = 0x9000, scoped, tag = 'internal scratch']
  #allocation2 [shape = 'f32[8,128]{1,0:T(8,128)}', space=vmem, size = 0x1000, scoped, tag = 'scratch operand']
  %s0 = inlined_call_operand.hbm [shape: f32[8,128], index: 0, kind: input, shape index: {}]
  %s1 = inlined_call_operand.hbm [shape: f32[128,128], index: 1, kind: input, shape index: {}]
  %s2 = inlined_call_operand.vmem [shape: f32[1,128], index: 2, kind: input, shape index: {}]
  %s3 = inlined_call_operand.hbm [shape: f32[8,128], index: 3, kind: output, shape index: {}]
  %s4 = sld [smem:[#allocation0]]
  $region38: #{tpu_custom_call.1} parent=0
    _
  %s6 = ssub.s32 1, %s4
  %s7 = scalar_select 0, %s6, %s4
  $region1: #{tpu_custom_call.1} parent=0
    #allocation3 [shape = 'u8[4096]{0}', space=vmem, size = 0x1000, scoped, tag = 'input window, operand 0, single buffered']
    #allocation4 [shape = 's32[1]{0}', space=sflag, size = 0x4, scoped, tag = 'scoped memory for tpu_custom_call.1']
    #allocation5 [shape = 's32[1]{0}', space=sflag, size = 0x4, scoped, tag = 'scoped memory for tpu_custom_call.1']
    #allocation6 [shape = 'u8[65536]{0}', space=vmem, size = 0x10000, scoped, tag = 'input window, operand 1, single buffered']
    #allocation7 [shape = 's32[1]{0}', space=sflag, size = 0x4, scoped, tag = 'scoped memory for tpu_custom_call.1']
    #allocation8 [shape = 'u8[4096]{0}', space=vmem, size = 0x1000, scoped, tag = 'output window, operand 0, single buffered']
    %8 = vsyncpa [#allocation4], 0
    %9 = vsyncpa [#allocation7], 0
    %10 = vsyncpa [#allocation5], 0
    // Predicated region
    $region2: #{tpu_custom_call.1} parent=1 // pred_check
      _
    $region3: #{tpu_custom_call.1} parent=1 // pred_check_branch
      %12 = sbr.rel (0) target = $region5
    $region4: #{tpu_custom_call.1} parent=1 // pred_region
      %14 = vsyncadd [#allocation4], 0
      %s16 = sshll.u32 %s0, 4
      %s17 = int_to_ptr.hbm [resolvable:$true] %s16
      %s18 = sshll.u32 [#allocation3], 4
      %s19 = int_to_ptr.vmem [resolvable:$true] %s18
      %21 = dma.hbm_to_vmem [thread:$0]  %s17, 128, %s19, [#allocation4]
    $region5: #{tpu_custom_call.1} parent=1 // pred_fallthru
      _
    // Predicated region
    $region6: #{tpu_custom_call.1} parent=1 // pred_check
      _
    $region7: #{tpu_custom_call.1} parent=1 // pred_check_branch
      %23 = sbr.rel (0) target = $region9
    $region8: #{tpu_custom_call.1} parent=1 // pred_region
      %25 = vsyncadd [#allocation7], 0
      %s26 = sshll.u32 %s1, 4
      %s27 = int_to_ptr.hbm [resolvable:$true] %s26
      %s28 = sshll.u32 [#allocation6], 4
      %s29 = int_to_ptr.vmem [resolvable:$true] %s28
      %34 = dma.hbm_to_vmem [thread:$0]  %s27, 2048, %s29, [#allocation7], 128, 128, 8
    $region9: #{tpu_custom_call.1} parent=1 // pred_fallthru
      _
    // Predicated region
    $region10: #{tpu_custom_call.1} parent=1 // pred_check
      _
    $region11: #{tpu_custom_call.1} parent=1 // pred_check_branch
      %36 = sbr.rel (0) target = $region13
    $region12: #{tpu_custom_call.1} parent=1 // pred_region
      _
    $region13: #{tpu_custom_call.1} parent=1 // pred_fallthru
      _
    // Predicated region
    $region14: #{tpu_custom_call.1} parent=1 // pred_check
      _
    $region15: #{tpu_custom_call.1} parent=1 // pred_check_branch
      %38 = sbr.rel (0) target = $region17
    $region16: #{tpu_custom_call.1} parent=1 // pred_region
      %40 = dma.done [#allocation4], 128
    $region17: #{tpu_custom_call.1} parent=1 // pred_fallthru
      _
    // Predicated region
    $region18: #{tpu_custom_call.1} parent=1 // pred_check
      _
    $region19: #{tpu_custom_call.1} parent=1 // pred_check_branch
      %42 = sbr.rel (0) target = $region21
    $region20: #{tpu_custom_call.1} parent=1 // pred_region
      %44 = dma.done [#allocation7], 2048
    $region21: #{tpu_custom_call.1} parent=1 // pred_fallthru
      _
    %p45 = scmp.eq.s32.totalorder 0, 0
    // Predicated region
    $region22: #{tpu_custom_call.1} parent=1 // pred_check
      %p46 = pneg %p45
    $region23: #{tpu_custom_call.1} parent=1 // pred_check_branch
      %48 = sbr.rel (%p46) target = $region25
    $region24: #{tpu_custom_call.1} parent=1 // pred_region
      %v49 = vld [vmem:[%s2] sm:$0x1]
      %v51 = vperm.slane %v49, 0
      %53 = vst [vmem:[#allocation2] sm:$0xff] %v51
    $region25: #{tpu_custom_call.1} parent=1 // pred_fallthru
      _
    %v54 = vld [vmem:[#allocation2] sm:$0xff]
    %v55 = vld [vmem:[#allocation3] sm:$0xff]
    %v56 = vld [vmem:[#allocation6] sm:$0xff]
    %v57 = vld [vmem:[#allocation6 + $0x8] sm:$0xff]
    %v58 = vld [vmem:[#allocation6 + $0x10] sm:$0xff]
    %v59 = vld [vmem:[#allocation6 + $0x18] sm:$0xff]
    %v60 = vld [vmem:[#allocation6 + $0x20] sm:$0xff]
    %v61 = vld [vmem:[#allocation6 + $0x28] sm:$0xff]
    %v62 = vld [vmem:[#allocation6 + $0x30] sm:$0xff]
    %v63 = vld [vmem:[#allocation6 + $0x38] sm:$0xff]
    %v64 = vld [vmem:[#allocation6 + $0x40] sm:$0xff]
    %v65 = vld [vmem:[#allocation6 + $0x48] sm:$0xff]
    %v66 = vld [vmem:[#allocation6 + $0x50] sm:$0xff]
    %v67 = vld [vmem:[#allocation6 + $0x58] sm:$0xff]
    %v68 = vld [vmem:[#allocation6 + $0x60] sm:$0xff]
    %v69 = vld [vmem:[#allocation6 + $0x68] sm:$0xff]
    %v70 = vld [vmem:[#allocation6 + $0x70] sm:$0xff]
    %v71 = vld [vmem:[#allocation6 + $0x78] sm:$0xff]
    %v72 = vand.u32 %v71, 4294901760
    %73 = vmatpush.msra.mxu0 %v72
    %v74 = vand.u32 %v70, 4294901760
    %75 = vmatpush.msra.mxu0 %v74
    %v76 = vand.u32 %v69, 4294901760
    %77 = vmatpush.msra.mxu0 %v76
    %v78 = vand.u32 %v68, 4294901760
    %79 = vmatpush.msra.mxu0 %v78
    %v80 = vand.u32 %v67, 4294901760
    %81 = vmatpush.msra.mxu0 %v80
    %v82 = vand.u32 %v66, 4294901760
    %83 = vmatpush.msra.mxu0 %v82
    %v84 = vand.u32 %v65, 4294901760
    %85 = vmatpush.msra.mxu0 %v84
    %v86 = vand.u32 %v64, 4294901760
    %87 = vmatpush.msra.mxu0 %v86
    %v88 = vand.u32 %v63, 4294901760
    %89 = vmatpush.msra.mxu0 %v88
    %v90 = vand.u32 %v62, 4294901760
    %91 = vmatpush.msra.mxu0 %v90
    %v92 = vand.u32 %v61, 4294901760
    %93 = vmatpush.msra.mxu0 %v92
    %v94 = vand.u32 %v60, 4294901760
    %95 = vmatpush.msra.mxu0 %v94
    %v96 = vand.u32 %v59, 4294901760
    %97 = vmatpush.msra.mxu0 %v96
    %v98 = vand.u32 %v58, 4294901760
    %99 = vmatpush.msra.mxu0 %v98
    %v100 = vand.u32 %v57, 4294901760
    %101 = vmatpush.msra.mxu0 %v100
    %v102 = vand.u32 %v56, 4294901760
    %103 = vmatpush.msra.mxu0 %v102
    %v104 = vand.u32 %v55, 4294901760
    %v105 = vsub.f32 %v55, %v104
    %v106 = vand.u32 %v105, 4294901760
    %v107 = vsub.f32 %v105, %v106
    %v108 = vand.u32 %v107, 4294901760
    %109 = vmatmul.f32.gmra.mxu0 %v108
    %v110 = vpop.f32.mrf.mxu0
    %v111 = vadd.f32 0.0, %v110
    %112 = vdwg.mxu0
    %v113 = vand.u32 %v71, 4294901760
    %v114 = vsub.f32 %v71, %v113
    %v115 = vand.u32 %v114, 4294901760
    %v116 = vsub.f32 %v114, %v115
    %v117 = vand.u32 %v116, 4294901760
    %118 = vmatpush.msra.mxu0 %v117
    %v119 = vand.u32 %v70, 4294901760
    %v120 = vsub.f32 %v70, %v119
    %v121 = vand.u32 %v120, 4294901760
    %v122 = vsub.f32 %v120, %v121
    %v123 = vand.u32 %v122, 4294901760
    %124 = vmatpush.msra.mxu0 %v123
    %v125 = vand.u32 %v69, 4294901760
    %v126 = vsub.f32 %v69, %v125
    %v127 = vand.u32 %v126, 4294901760
    %v128 = vsub.f32 %v126, %v127
    %v129 = vand.u32 %v128, 4294901760
    %130 = vmatpush.msra.mxu0 %v129
    %v131 = vand.u32 %v68, 4294901760
    %v132 = vsub.f32 %v68, %v131
    %v133 = vand.u32 %v132, 4294901760
    %v134 = vsub.f32 %v132, %v133
    %v135 = vand.u32 %v134, 4294901760
    %136 = vmatpush.msra.mxu0 %v135
    %v137 = vand.u32 %v67, 4294901760
    %v138 = vsub.f32 %v67, %v137
    %v139 = vand.u32 %v138, 4294901760
    %v140 = vsub.f32 %v138, %v139
    %v141 = vand.u32 %v140, 4294901760
    %142 = vmatpush.msra.mxu0 %v141
    %v143 = vand.u32 %v66, 4294901760
    %v144 = vsub.f32 %v66, %v143
    %v145 = vand.u32 %v144, 4294901760
    %v146 = vsub.f32 %v144, %v145
    %v147 = vand.u32 %v146, 4294901760
    %148 = vmatpush.msra.mxu0 %v147
    %v149 = vand.u32 %v65, 4294901760
    %v150 = vsub.f32 %v65, %v149
    %v151 = vand.u32 %v150, 4294901760
    %v152 = vsub.f32 %v150, %v151
    %v153 = vand.u32 %v152, 4294901760
    %154 = vmatpush.msra.mxu0 %v153
    %v155 = vand.u32 %v64, 4294901760
    %v156 = vsub.f32 %v64, %v155
    %v157 = vand.u32 %v156, 4294901760
    %v158 = vsub.f32 %v156, %v157
    %v159 = vand.u32 %v158, 4294901760
    %160 = vmatpush.msra.mxu0 %v159
    %v161 = vand.u32 %v63, 4294901760
    %v162 = vsub.f32 %v63, %v161
    %v163 = vand.u32 %v162, 4294901760
    %v164 = vsub.f32 %v162, %v163
    %v165 = vand.u32 %v164, 4294901760
    %166 = vmatpush.msra.mxu0 %v165
    %v167 = vand.u32 %v62, 4294901760
    %v168 = vsub.f32 %v62, %v167
    %v169 = vand.u32 %v168, 4294901760
    %v170 = vsub.f32 %v168, %v169
    %v171 = vand.u32 %v170, 4294901760
    %172 = vmatpush.msra.mxu0 %v171
    %v173 = vand.u32 %v61, 4294901760
    %v174 = vsub.f32 %v61, %v173
    %v175 = vand.u32 %v174, 4294901760
    %v176 = vsub.f32 %v174, %v175
    %v177 = vand.u32 %v176, 4294901760
    %178 = vmatpush.msra.mxu0 %v177
    %v179 = vand.u32 %v60, 4294901760
    %v180 = vsub.f32 %v60, %v179
    %v181 = vand.u32 %v180, 4294901760
    %v182 = vsub.f32 %v180, %v181
    %v183 = vand.u32 %v182, 4294901760
    %184 = vmatpush.msra.mxu0 %v183
    %v185 = vand.u32 %v59, 4294901760
    %v186 = vsub.f32 %v59, %v185
    %v187 = vand.u32 %v186, 4294901760
    %v188 = vsub.f32 %v186, %v187
    %v189 = vand.u32 %v188, 4294901760
    %190 = vmatpush.msra.mxu0 %v189
    %v191 = vand.u32 %v58, 4294901760
    %v192 = vsub.f32 %v58, %v191
    %v193 = vand.u32 %v192, 4294901760
    %v194 = vsub.f32 %v192, %v193
    %v195 = vand.u32 %v194, 4294901760
    %196 = vmatpush.msra.mxu0 %v195
    %v197 = vand.u32 %v57, 4294901760
    %v198 = vsub.f32 %v57, %v197
    %v199 = vand.u32 %v198, 4294901760
    %v200 = vsub.f32 %v198, %v199
    %v201 = vand.u32 %v200, 4294901760
    %202 = vmatpush.msra.mxu0 %v201
    %v203 = vand.u32 %v56, 4294901760
    %v204 = vsub.f32 %v56, %v203
    %v205 = vand.u32 %v204, 4294901760
    %v206 = vsub.f32 %v204, %v205
    %v207 = vand.u32 %v206, 4294901760
    %208 = vmatpush.msra.mxu0 %v207
    %v209 = vand.u32 %v55, 4294901760
    %210 = vmatmul.f32.gmra.mxu0 %v209
    %v211 = vpop.f32.mrf.mxu0
    %v212 = vadd.f32 %v111, %v211
    %213 = vdwg.mxu0
    %v214 = vand.u32 %v71, 4294901760
    %v215 = vsub.f32 %v71, %v214
    %216 = vmatpush.msra.mxu0 %v215
    %v217 = vand.u32 %v70, 4294901760
    %v218 = vsub.f32 %v70, %v217
    %219 = vmatpush.msra.mxu0 %v218
    %v220 = vand.u32 %v69, 4294901760
    %v221 = vsub.f32 %v69, %v220
    %222 = vmatpush.msra.mxu0 %v221
    %v223 = vand.u32 %v68, 4294901760
    %v224 = vsub.f32 %v68, %v223
    %225 = vmatpush.msra.mxu0 %v224
    %v226 = vand.u32 %v67, 4294901760
    %v227 = vsub.f32 %v67, %v226
    %228 = vmatpush.msra.mxu0 %v227
    %v229 = vand.u32 %v66, 4294901760
    %v230 = vsub.f32 %v66, %v229
    %231 = vmatpush.msra.mxu0 %v230
    %v232 = vand.u32 %v65, 4294901760
    %v233 = vsub.f32 %v65, %v232
    %234 = vmatpush.msra.mxu0 %v233
    %v235 = vand.u32 %v64, 4294901760
    %v236 = vsub.f32 %v64, %v235
    %237 = vmatpush.msra.mxu0 %v236
    %v238 = vand.u32 %v63, 4294901760
    %v239 = vsub.f32 %v63, %v238
    %240 = vmatpush.msra.mxu0 %v239
    %v241 = vand.u32 %v62, 4294901760
    %v242 = vsub.f32 %v62, %v241
    %243 = vmatpush.msra.mxu0 %v242
    %v244 = vand.u32 %v61, 4294901760
    %v245 = vsub.f32 %v61, %v244
    %246 = vmatpush.msra.mxu0 %v245
    %v247 = vand.u32 %v60, 4294901760
    %v248 = vsub.f32 %v60, %v247
    %249 = vmatpush.msra.mxu0 %v248
    %v250 = vand.u32 %v59, 4294901760
    %v251 = vsub.f32 %v59, %v250
    %252 = vmatpush.msra.mxu0 %v251
    %v253 = vand.u32 %v58, 4294901760
    %v254 = vsub.f32 %v58, %v253
    %255 = vmatpush.msra.mxu0 %v254
    %v256 = vand.u32 %v57, 4294901760
    %v257 = vsub.f32 %v57, %v256
    %258 = vmatpush.msra.mxu0 %v257
    %v259 = vand.u32 %v56, 4294901760
    %v260 = vsub.f32 %v56, %v259
    %261 = vmatpush.msra.mxu0 %v260
    %v262 = vand.u32 %v55, 4294901760
    %v263 = vsub.f32 %v55, %v262
    %264 = vmatmul.f32.gmra.mxu0 %v263
    %v265 = vpop.f32.mrf.mxu0
    %v266 = vadd.f32 %v212, %v265
    %267 = vdwg.mxu0
    %v268 = vand.u32 %v71, 4294901760
    %269 = vmatpush.msra.mxu0 %v268
    %v270 = vand.u32 %v70, 4294901760
    %271 = vmatpush.msra.mxu0 %v270
    %v272 = vand.u32 %v69, 4294901760
    %273 = vmatpush.msra.mxu0 %v272
    %v274 = vand.u32 %v68, 4294901760
    %275 = vmatpush.msra.mxu0 %v274
    %v276 = vand.u32 %v67, 4294901760
    %277 = vmatpush.msra.mxu0 %v276
    %v278 = vand.u32 %v66, 4294901760
    %279 = vmatpush.msra.mxu0 %v278
    %v280 = vand.u32 %v65, 4294901760
    %281 = vmatpush.msra.mxu0 %v280
    %v282 = vand.u32 %v64, 4294901760
    %283 = vmatpush.msra.mxu0 %v282
    %v284 = vand.u32 %v63, 4294901760
    %285 = vmatpush.msra.mxu0 %v284
    %v286 = vand.u32 %v62, 4294901760
    %287 = vmatpush.msra.mxu0 %v286
    %v288 = vand.u32 %v61, 4294901760
    %289 = vmatpush.msra.mxu0 %v288
    %v290 = vand.u32 %v60, 4294901760
    %291 = vmatpush.msra.mxu0 %v290
    %v292 = vand.u32 %v59, 4294901760
    %293 = vmatpush.msra.mxu0 %v292
    %v294 = vand.u32 %v58, 4294901760
    %295 = vmatpush.msra.mxu0 %v294
    %v296 = vand.u32 %v57, 4294901760
    %297 = vmatpush.msra.mxu0 %v296
    %v298 = vand.u32 %v56, 4294901760
    %299 = vmatpush.msra.mxu0 %v298
    %v300 = vand.u32 %v55, 4294901760
    %v301 = vsub.f32 %v55, %v300
    %v302 = vand.u32 %v301, 4294901760
    %303 = vmatmul.f32.gmra.mxu0 %v302
    %v304 = vpop.f32.mrf.mxu0
    %v305 = vadd.f32 %v266, %v304
    %306 = vdwg.mxu0
    %v307 = vand.u32 %v71, 4294901760
    %v308 = vsub.f32 %v71, %v307
    %v309 = vand.u32 %v308, 4294901760
    %310 = vmatpush.msra.mxu0 %v309
    %v311 = vand.u32 %v70, 4294901760
    %v312 = vsub.f32 %v70, %v311
    %v313 = vand.u32 %v312, 4294901760
    %314 = vmatpush.msra.mxu0 %v313
    %v315 = vand.u32 %v69, 4294901760
    %v316 = vsub.f32 %v69, %v315
    %v317 = vand.u32 %v316, 4294901760
    %318 = vmatpush.msra.mxu0 %v317
    %v319 = vand.u32 %v68, 4294901760
    %v320 = vsub.f32 %v68, %v319
    %v321 = vand.u32 %v320, 4294901760
    %322 = vmatpush.msra.mxu0 %v321
    %v323 = vand.u32 %v67, 4294901760
    %v324 = vsub.f32 %v67, %v323
    %v325 = vand.u32 %v324, 4294901760
    %326 = vmatpush.msra.mxu0 %v325
    %v327 = vand.u32 %v66, 4294901760
    %v328 = vsub.f32 %v66, %v327
    %v329 = vand.u32 %v328, 4294901760
    %330 = vmatpush.msra.mxu0 %v329
    %v331 = vand.u32 %v65, 4294901760
    %v332 = vsub.f32 %v65, %v331
    %v333 = vand.u32 %v332, 4294901760
    %334 = vmatpush.msra.mxu0 %v333
    %v335 = vand.u32 %v64, 4294901760
    %v336 = vsub.f32 %v64, %v335
    %v337 = vand.u32 %v336, 4294901760
    %338 = vmatpush.msra.mxu0 %v337
    %v339 = vand.u32 %v63, 4294901760
    %v340 = vsub.f32 %v63, %v339
    %v341 = vand.u32 %v340, 4294901760
    %342 = vmatpush.msra.mxu0 %v341
    %v343 = vand.u32 %v62, 4294901760
    %v344 = vsub.f32 %v62, %v343
    %v345 = vand.u32 %v344, 4294901760
    %346 = vmatpush.msra.mxu0 %v345
    %v347 = vand.u32 %v61, 4294901760
    %v348 = vsub.f32 %v61, %v347
    %v349 = vand.u32 %v348, 4294901760
    %350 = vmatpush.msra.mxu0 %v349
    %v351 = vand.u32 %v60, 4294901760
    %v352 = vsub.f32 %v60, %v351
    %v353 = vand.u32 %v352, 4294901760
    %354 = vmatpush.msra.mxu0 %v353
    %v355 = vand.u32 %v59, 4294901760
    %v356 = vsub.f32 %v59, %v355
    %v357 = vand.u32 %v356, 4294901760
    %358 = vmatpush.msra.mxu0 %v357
    %v359 = vand.u32 %v58, 4294901760
    %v360 = vsub.f32 %v58, %v359
    %v361 = vand.u32 %v360, 4294901760
    %362 = vmatpush.msra.mxu0 %v361
    %v363 = vand.u32 %v57, 4294901760
    %v364 = vsub.f32 %v57, %v363
    %v365 = vand.u32 %v364, 4294901760
    %366 = vmatpush.msra.mxu0 %v365
    %v367 = vand.u32 %v56, 4294901760
    %v368 = vsub.f32 %v56, %v367
    %v369 = vand.u32 %v368, 4294901760
    %370 = vmatpush.msra.mxu0 %v369
    %v371 = vand.u32 %v55, 4294901760
    %372 = vmatmul.f32.gmra.mxu0 %v371
    %v373 = vpop.f32.mrf.mxu0
    %v374 = vadd.f32 %v305, %v373
    %375 = vdwg.mxu0
    %v376 = vand.u32 %v71, 4294901760
    %377 = vmatpush.msra.mxu0 %v376
    %v378 = vand.u32 %v70, 4294901760
    %379 = vmatpush.msra.mxu0 %v378
    %v380 = vand.u32 %v69, 4294901760
    %381 = vmatpush.msra.mxu0 %v380
    %v382 = vand.u32 %v68, 4294901760
    %383 = vmatpush.msra.mxu0 %v382
    %v384 = vand.u32 %v67, 4294901760
    %385 = vmatpush.msra.mxu0 %v384
    %v386 = vand.u32 %v66, 4294901760
    %387 = vmatpush.msra.mxu0 %v386
    %v388 = vand.u32 %v65, 4294901760
    %389 = vmatpush.msra.mxu0 %v388
    %v390 = vand.u32 %v64, 4294901760
    %391 = vmatpush.msra.mxu0 %v390
    %v392 = vand.u32 %v63, 4294901760
    %393 = vmatpush.msra.mxu0 %v392
    %v394 = vand.u32 %v62, 4294901760
    %395 = vmatpush.msra.mxu0 %v394
    %v396 = vand.u32 %v61, 4294901760
    %397 = vmatpush.msra.mxu0 %v396
    %v398 = vand.u32 %v60, 4294901760
    %399 = vmatpush.msra.mxu0 %v398
    %v400 = vand.u32 %v59, 4294901760
    %401 = vmatpush.msra.mxu0 %v400
    %v402 = vand.u32 %v58, 4294901760
    %403 = vmatpush.msra.mxu0 %v402
    %v404 = vand.u32 %v57, 4294901760
    %405 = vmatpush.msra.mxu0 %v404
    %v406 = vand.u32 %v56, 4294901760
    %407 = vmatpush.msra.mxu0 %v406
    %v408 = vand.u32 %v55, 4294901760
    %409 = vmatmul.f32.gmra.mxu0 %v408
    %v410 = vpop.f32.mrf.mxu0
    %v411 = vadd.f32 %v374, %v410
    %412 = vdwg.mxu0
    %v413 = vadd.f32 %v54, %v411
    %414 = vst [vmem:[#allocation2] sm:$0xff] %v413
    // Predicated region
    $region26: #{tpu_custom_call.1} parent=1 // pred_check
      %p415 = pneg %p45
    $region27: #{tpu_custom_call.1} parent=1 // pred_check_branch
      %417 = sbr.rel (%p415) target = $region29
    $region28: #{tpu_custom_call.1} parent=1 // pred_region
      %v418 = vld [vmem:[#allocation2] sm:$0xff]
      %v419 = vmax.f32 %v418, 0.0
      %420 = vst [vmem:[#allocation8] sm:$0xff] %v419
    $region29: #{tpu_custom_call.1} parent=1 // pred_fallthru
      _
    // Predicated region
    $region30: #{tpu_custom_call.1} parent=1 // pred_check
      _
    $region31: #{tpu_custom_call.1} parent=1 // pred_check_branch
      %422 = sbr.rel (0) target = $region33
    $region32: #{tpu_custom_call.1} parent=1 // pred_region
      %424 = vsyncadd [#allocation5], 0
      %s426 = sshll.u32 [#allocation8], 4
      %s427 = int_to_ptr.vmem [resolvable:$true] %s426
      %s428 = sshll.u32 %s3, 4
      %s429 = int_to_ptr.hbm [resolvable:$true] %s428
      %431 = dma.vmem_to_hbm [thread:$0]  %s427, 128, %s429, [#allocation5]
    $region33: #{tpu_custom_call.1} parent=1 // pred_fallthru
      _
    // Predicated region
    $region34: #{tpu_custom_call.1} parent=1 // pred_check
      _
    $region35: #{tpu_custom_call.1} parent=1 // pred_check_branch
      %433 = sbr.rel (0) target = $region37
    $region36: #{tpu_custom_call.1} parent=1 // pred_region
      %435 = dma.done [#allocation5], 128
    $region37: #{tpu_custom_call.1} parent=1 // pred_fallthru
      _
    %436 = vsyncpa [#allocation4], 1
    %437 = vsyncpa [#allocation7], 1
    %438 = vsyncpa [#allocation5], 1

</llo_original>
